<compile_context>
chip_gen: v6e
topology: v6e:2x2x1
jax: 0.10.0
libtpu: 0.0.40
codegen_flags: <defaults>
</compile_context>

<pallas_src>
import functools

import numpy as np
import jax
import jax.numpy as jnp
from jax.experimental import pallas as pl
from jax.experimental.pallas import tpu as pltpu

LANE = 128


def _background_loss_kernel(p_ref, beta_ref, pid_ref, pids_ref,
                            sig_ref, noise_ref,
                            pids_rep, run_max, noise_sum):
    pi = pl.program_id(0)                  # pid-block index ("parallel")
    hi = pl.program_id(1)                  # hit-block index ("arbitrary", carried)
    p_blk = run_max.shape[0]
    n_blk = beta_ref.shape[1]
    n_chunks = n_blk // LANE
    p_strip = min(p_blk, 64)               # accumulator strip: <= 8 vregs live
    n_strips = p_blk // p_strip
    unroll = min(n_chunks, 8)

    @pl.when(hi == 0)
    def _init():
        # Hoisted lane-broadcast of the pid column: once per pid block, not per step.
        pids_rep[...] = jnp.broadcast_to(pids_ref[...], (p_blk, LANE))
        # beta = sigmoid(.) > 0, so 0 is a safe identity for the running max.
        run_max[...] = jnp.zeros_like(run_max)
        noise_sum[...] = jnp.zeros_like(noise_sum)

    # ---- per-pid running max over this hit block ---------------------------
    # Two-level loop keeps each strip's partial max in vregs across all lane
    # chunks, so no (p_blk, n_blk) intermediate is stored: ~3 VALU ops per
    # (8, 128) tile, one (p_strip, 128) writeback per strip per grid step.
    for s in range(n_strips):                                    # static, small
        rows = pl.ds(s * p_strip, p_strip)
        pids_s = pids_rep[rows, :]                               # (p_strip, 128) i32
        acc0 = run_max[rows, :]                                  # (p_strip, 128) f32

        def chunk_body(c, acc, pids_s=pids_s):
            off = pl.multiple_of(c * LANE, LANE)
            pid_c = pid_ref[:, pl.ds(off, LANE)]                 # (1, 128) i32
            beta_c = beta_ref[:, pl.ds(off, LANE)]               # (1, 128) f32
            member = pid_c == pids_s                             # (p_strip, 128)
            return jnp.maximum(acc, jnp.where(member, beta_c, 0.0))

        acc = jax.lax.fori_loop(0, n_chunks, chunk_body, acc0, unroll=unroll)
        run_max[rows, :] = acc

    # ---- noise betas: per-lane partial sums, pid block 0 only ---------------
    @pl.when(pi == 0)
    def _noise():
        def noise_body(c, ns):
            off = pl.multiple_of(c * LANE, LANE)
            pid_c = pid_ref[:, pl.ds(off, LANE)]
            beta_c = beta_ref[:, pl.ds(off, LANE)]
            return ns + jnp.where(pid_c == 0, beta_c, 0.0)

        noise_sum[...] = jax.lax.fori_loop(0, n_chunks, noise_body,
                                           noise_sum[...], unroll=unroll)

    # ---- finalize: one cross-lane reduce per pid block ----------------------
    @pl.when(hi == pl.num_programs(1) - 1)
    def _finalize():
        # beta = sigmoid(.) > 0  =>  beta[argmax(mask * beta)] == max member
        # beta. Only diverges from torch.argmax tie-breaking if every member
        # beta underflows to exactly 0.
        beta_alpha = jnp.max(run_max[...], axis=1, keepdims=True)        # (p_blk, 1)
        row = jax.lax.broadcasted_iota(jnp.int32, (p_blk, 1), 0) + pi * p_blk
        valid = row < p_ref[0]                                           # mask pid padding
        sig_part = jnp.sum(jnp.where(valid, 1.0 - beta_alpha, 0.0))
        sig_ref[...] = jnp.broadcast_to(sig_part, (1, 1, LANE))
        noise_part = jnp.sum(noise_sum[...])                             # 0 for pi > 0
        noise_ref[...] = jnp.broadcast_to(noise_part, (1, 1, LANE))


def _next_pow2(x):
    return 1 << (max(int(x), 1) - 1).bit_length()


def _pick_hit_block(n_pad, p_blk):
    """Largest power-of-two hit block whose *actual* VMEM residents fit a
    conservative budget valid on every generation (v5e/v6e/v7x defaults).

    Residents: beta + particle_id blocks (sublane-padded to 8 rows, double
    buffered) ~= 128 * n_blk bytes; pid column + lane-replicated pids +
    running-max scratch ~= 2048 * p_blk bytes."""
    budget = 12 * 1024 * 1024
    avail = max(budget - 2048 * p_blk, 128 * 128)
    cap = avail // 128
    blk = 128
    while blk * 2 <= min(cap, 4096, n_pad):
        blk *= 2
    return blk


@functools.lru_cache(maxsize=None)
def _build_background_loss_call(n_pad, p_pad, n_blk, p_blk, sb):
    n_hit_blocks = n_pad // n_blk
    n_pid_blocks = p_pad // p_blk

    call = pl.pallas_call(
        _background_loss_kernel,
        out_shape=(
            jax.ShapeDtypeStruct((n_pid_blocks, 1, LANE), jnp.float32),   # signal partials
            jax.ShapeDtypeStruct((n_pid_blocks, 1, LANE), jnp.float32),   # noise partials
        ),
        grid_spec=pltpu.PrefetchScalarGridSpec(
            num_scalar_prefetch=1,                       # p = real pid count, in SMEM
            grid=(n_pid_blocks, n_hit_blocks),
            in_specs=[
                pl.BlockSpec((1, n_blk), lambda pi, hi, p: (0, hi)),      # beta
                pl.BlockSpec((1, n_blk), lambda pi, hi, p: (0, hi)),      # particle_id
                pl.BlockSpec((p_blk, 1), lambda pi, hi, p: (pi, 0)),      # pid column
            ],
            out_specs=[
                pl.BlockSpec((1, 1, LANE), lambda pi, hi, p: (pi, 0, 0)),
                pl.BlockSpec((1, 1, LANE), lambda pi, hi, p: (pi, 0, 0)),
            ],
            scratch_shapes=[
                pltpu.VMEM((p_blk, LANE), jnp.int32),    # lane-replicated pids
                pltpu.VMEM((p_blk, LANE), jnp.float32),  # per-lane running max
                pltpu.VMEM((1, LANE), jnp.float32),      # per-lane noise-beta sums
            ],
        ),
        compiler_params=pltpu.CompilerParams(
            dimension_semantics=("parallel", "arbitrary"),   # pid blocks megacore-shardable
            vmem_limit_bytes=32 * 1024 * 1024,
        ),
        cost_estimate=pl.CostEstimate(
            flops=3 * p_pad * n_pad + 2 * n_pad,
            transcendentals=0,
            bytes_accessed=8 * n_pad * n_pid_blocks + 4 * p_pad + 1024 * n_pid_blocks,
        ),
    )

    def run(p_arr, ncnt_arr, beta_p, pid_p, pids_col):
        sig_parts, noise_parts = call(p_arr, beta_p, pid_p, pids_col)
        p_i = p_arr[0]
        sig_sum = jnp.sum(sig_parts[:, 0, 0])
        # torch.mean over an empty pid set is NaN; we return 0 for the signal
        # term when p == 0 (explicit guard, documented divergence).
        sig = jnp.where(p_i > 0,
                        sig_sum / jnp.maximum(p_i, 1).astype(jnp.float32),
                        jnp.float32(0.0))
        ncnt = ncnt_arr[0]
        noise = jnp.where(ncnt > 0,
                          sb * jnp.sum(noise_parts[:, 0, 0])
                          / jnp.maximum(ncnt, 1).astype(jnp.float32),
                          jnp.float32(0.0))
        return sig + noise

    return jax.jit(run)


_HOST_BUFS = {}


def _host_buffers(n_pad, p_pad):
    key = (n_pad, p_pad)
    bufs = _HOST_BUFS.get(key)
    if bufs is None:
        bufs = (np.empty((1, n_pad), np.float32),
                np.empty((1, n_pad), np.int32),
                np.empty((p_pad, 1), np.int32))
        _HOST_BUFS[key] = bufs
    return bufs


def background_loss(beta, particle_id, ec_hit_mask, sb=0.1):
    """Forward pass of BackgroundLoss. Dynamic-shape glue (boolean-mask
    compaction + unique) stays on host; padding is bucketed to powers of two
    so only a handful of kernel variants ever compile.

    # TODO(synk): torch.unique / boolean-mask compaction have data-dependent
    # output shapes, so they remain host-side glue (this also pulls beta to
    # host, which breaks jit/grad composition inside training loops).
    # TODO(synk): for events with thousands of pids, host-side
    # unique(return_inverse=True) + an in-kernel segmented max would turn the
    # O(P x N) broadcast-compare into an O(N) streaming pass.
    """
    pid_np = np.asarray(particle_id, dtype=np.int32)
    ec_np = np.asarray(ec_hit_mask, dtype=bool)
    pid_sel = pid_np[ec_np]                           # particle_id[ec_hit_mask]
    beta_np = np.asarray(beta, dtype=np.float32)
    n = int(pid_sel.shape[0])
    assert beta_np.shape[0] == n, "beta must match the ec-masked hits"

    pids = np.unique(pid_sel[pid_sel > 0]).astype(np.int32)
    p = int(pids.shape[0])
    n_noise = int(np.count_nonzero(pid_sel == 0))     # host-known noise count

    n_pad = max(128, _next_pow2(n))
    p_pad = max(8, _next_pow2(p))
    p_blk = p_pad if p_pad <= 512 else 512
    n_blk = _pick_hit_block(n_pad, p_blk)

    beta_buf, pid_buf, pids_buf = _host_buffers(n_pad, p_pad)
    beta_buf[...] = 0.0
    beta_buf[0, :n] = beta_np
    pid_buf[...] = -1                                 # hit padding: never a pid, never noise
    pid_buf[0, :n] = pid_sel
    pids_buf[...] = -1                                # pid padding (masked via row < p)
    pids_buf[:p, 0] = pids

    run = _build_background_loss_call(n_pad, p_pad, n_blk, p_blk, float(sb))
    return run(jnp.asarray([p], jnp.int32), jnp.asarray([n_noise], jnp.int32),
               jnp.asarray(beta_buf), jnp.asarray(pid_buf), jnp.asarray(pids_buf))


if __name__ == "__main__":
    key = jax.random.PRNGKey(0)
    k1, k2, k3 = jax.random.split(key, 3)

    M = 48                                                    # total hits
    particle_id_full = jax.random.randint(k1, (M,), 0, 6)     # 0 == noise
    ec_hit_mask = jax.random.bernoulli(k2, 0.75, (M,))
    n_sel = int(np.asarray(ec_hit_mask).sum())
    beta = jax.nn.sigmoid(jax.random.normal(k3, (n_sel,), dtype=jnp.float32))

    loss = background_loss(beta, particle_id_full, ec_hit_mask, sb=0.1)
    loss = jax.block_until_ready(loss)

    # pure numpy reference of the PyTorch semantics
    b = np.asarray(beta, dtype=np.float64)
    pid = np.asarray(particle_id_full)[np.asarray(ec_hit_mask)]
    pids_ref = np.unique(pid[pid > 0])
    pid_masks = pid[:, None] == pids_ref[None, :]
    alphas = np.argmax(pid_masks * b[:, None], axis=0)
    ref = np.mean(1.0 - b[alphas])
    noise = pid == 0
    if noise.any():
        ref += 0.1 * np.mean(b[noise])

    got = float(np.asarray(loss))
    assert np.allclose(got, ref, rtol=1e-5, atol=1e-5), (got, ref)
    print("KERNEL_OK")
</pallas_src>

<mosaic_0001>
module attributes {stable_mosaic.version = 11 : i64} {
  func.func @_background_loss_kernel(%arg0: i32, %arg1: i32, %arg2: memref<1xi32, #tpu.memory_space<smem>>, %arg3: memref<1x128xf32, #tpu.memory_space<vmem>>, %arg4: memref<1x128xi32, #tpu.memory_space<vmem>>, %arg5: memref<8x1xi32, #tpu.memory_space<vmem>>, %arg6: memref<1x1x128xf32, #tpu.memory_space<vmem>>, %arg7: memref<1x1x128xf32, #tpu.memory_space<vmem>>, %arg8: memref<8x128xi32, #tpu.memory_space<vmem>>, %arg9: memref<8x128xf32, #tpu.memory_space<vmem>>, %arg10: memref<1x128xf32, #tpu.memory_space<vmem>>) attributes {dimension_semantics = [#tpu.dimension_semantics<parallel>, #tpu.dimension_semantics<arbitrary>], iteration_bounds = array<i64: 1, 1>, scalar_prefetch = 1 : i64, scratch_operands = 3 : i64, tpu.core_type = #tpu.core_type<tc>, window_params = [{transform_indices = @transform_0, window_bounds = array<i64: 1, 128>}, {transform_indices = @transform_1, window_bounds = array<i64: 1, 128>}, {transform_indices = @transform_2, window_bounds = array<i64: 8, 1>}, {transform_indices = @transform_3, window_bounds = array<i64: 1, 1, 128>}, {transform_indices = @transform_4, window_bounds = array<i64: 1, 1, 128>}]} {
    %c0_i32 = arith.constant 0 : i32
    %0 = arith.cmpi eq, %arg1, %c0_i32 : i32
    %1 = arith.extui %0 : i1 to i32
    %c0_i32_0 = arith.constant 0 : i32
    %2 = arith.cmpi ne, %1, %c0_i32_0 : i32
    scf.if %2 {
      %c0_13 = arith.constant 0 : index
      %c0_14 = arith.constant 0 : index
      %25 = vector.load %arg5[%c0_13, %c0_14] : memref<8x1xi32, #tpu.memory_space<vmem>>, vector<8x1xi32>
      %26 = vector.shape_cast %25 : vector<8x1xi32> to vector<8x1xi32>
      %27 = vector.broadcast %26 : vector<8x1xi32> to vector<8x128xi32>
      %c0_15 = arith.constant 0 : index
      %c0_16 = arith.constant 0 : index
      %28 = vector.load %arg8[%c0_15, %c0_16] : memref<8x128xi32, #tpu.memory_space<vmem>>, vector<8x128xi32>
      tpu.vector_store %arg8[%c0_15, %c0_16], %27 {strides = array<i32>} : memref<8x128xi32, #tpu.memory_space<vmem>>, vector<8x128xi32>,
      %cst_17 = arith.constant 0.000000e+00 : f32
      %29 = vector.broadcast %cst_17 : f32 to vector<8x128xf32>
      %c0_18 = arith.constant 0 : index
      %c0_19 = arith.constant 0 : index
      %30 = vector.load %arg9[%c0_18, %c0_19] : memref<8x128xf32, #tpu.memory_space<vmem>>, vector<8x128xf32>
      tpu.vector_store %arg9[%c0_18, %c0_19], %29 {strides = array<i32>} : memref<8x128xf32, #tpu.memory_space<vmem>>, vector<8x128xf32>,
      %cst_20 = arith.constant 0.000000e+00 : f32
      %31 = vector.broadcast %cst_20 : f32 to vector<1x128xf32>
      %c0_21 = arith.constant 0 : index
      %c0_22 = arith.constant 0 : index
      %32 = vector.load %arg10[%c0_21, %c0_22] : memref<1x128xf32, #tpu.memory_space<vmem>>, vector<1x128xf32>
      tpu.vector_store %arg10[%c0_21, %c0_22], %31 {strides = array<i32>} : memref<1x128xf32, #tpu.memory_space<vmem>>, vector<1x128xf32>,
    } else {
    }
    %c0 = arith.constant 0 : index
    %c0_1 = arith.constant 0 : index
    %3 = vector.load %arg8[%c0, %c0_1] : memref<8x128xi32, #tpu.memory_space<vmem>>, vector<8x128xi32>
    %c0_2 = arith.constant 0 : index
    %c0_3 = arith.constant 0 : index
    %4 = vector.load %arg9[%c0_2, %c0_3] : memref<8x128xf32, #tpu.memory_space<vmem>>, vector<8x128xf32>
    %c0_i32_4 = arith.constant 0 : i32
    %c128_i32 = arith.constant 128 : i32
    %5 = arith.muli %c0_i32_4, %c128_i32 : i32
    %6 = tpu.assume_multiple %5, 128 : i32
    %c0_5 = arith.constant 0 : index
    %7 = arith.index_cast %6 : i32 to index
    %8 = vector.load %arg4[%c0_5, %7] : memref<1x128xi32, #tpu.memory_space<vmem>>, vector<1x128xi32>
    %c0_6 = arith.constant 0 : index
    %9 = arith.index_cast %6 : i32 to index
    %10 = vector.load %arg3[%c0_6, %9] : memref<1x128xf32, #tpu.memory_space<vmem>>, vector<1x128xf32>
    %11 = vector.broadcast %8 : vector<1x128xi32> to vector<8x128xi32>
    %12 = arith.cmpi eq, %11, %3 : vector<8x128xi32>
    %cst = arith.constant 0.000000e+00 : f32
    %13 = vector.shape_cast %10 : vector<1x128xf32> to vector<1x128xf32>
    %14 = vector.broadcast %13 : vector<1x128xf32> to vector<8x128xf32>
    %15 = vector.broadcast %cst : f32 to vector<8x128xf32>
    %16 = arith.select %12, %14, %15 : vector<8x128xi1>, vector<8x128xf32>
    %17 = arith.maximumf %4, %16 : vector<8x128xf32>
    %c1_i32 = arith.constant 1 : i32
    %c0_7 = arith.constant 0 : index
    %c0_8 = arith.constant 0 : index
    %18 = vector.load %arg9[%c0_7, %c0_8] : memref<8x128xf32, #tpu.memory_space<vmem>>, vector<8x128xf32>
    tpu.vector_store %arg9[%c0_7, %c0_8], %17 {strides = array<i32>} : memref<8x128xf32, #tpu.memory_space<vmem>>, vector<8x128xf32>,
    %c0_i32_9 = arith.constant 0 : i32
    %19 = arith.cmpi eq, %arg0, %c0_i32_9 : i32
    %20 = arith.extui %19 : i1 to i32
    %c0_i32_10 = arith.constant 0 : i32
    %21 = arith.cmpi ne, %20, %c0_i32_10 : i32
    scf.if %21 {
      %c0_13 = arith.constant 0 : index
      %c0_14 = arith.constant 0 : index
      %25 = vector.load %arg10[%c0_13, %c0_14] : memref<1x128xf32, #tpu.memory_space<vmem>>, vector<1x128xf32>
      %c0_i32_15 = arith.constant 0 : i32
      %c128_i32_16 = arith.constant 128 : i32
      %26 = arith.muli %c0_i32_15, %c128_i32_16 : i32
      %27 = tpu.assume_multiple %26, 128 : i32
      %c0_17 = arith.constant 0 : index
      %28 = arith.index_cast %27 : i32 to index
      %29 = vector.load %arg4[%c0_17, %28] : memref<1x128xi32, #tpu.memory_space<vmem>>, vector<1x128xi32>
      %c0_18 = arith.constant 0 : index
      %30 = arith.index_cast %27 : i32 to index
      %31 = vector.load %arg3[%c0_18, %30] : memref<1x128xf32, #tpu.memory_space<vmem>>, vector<1x128xf32>
      %c0_i32_19 = arith.constant 0 : i32
      %32 = vector.broadcast %c0_i32_19 : i32 to vector<1x128xi32>
      %33 = arith.cmpi eq, %29, %32 : vector<1x128xi32>
      %cst_20 = arith.constant 0.000000e+00 : f32
      %34 = vector.broadcast %cst_20 : f32 to vector<1x128xf32>
      %35 = arith.select %33, %31, %34 : vector<1x128xi1>, vector<1x128xf32>
      %36 = arith.addf %25, %35 : vector<1x128xf32>
      %c1_i32_21 = arith.constant 1 : i32
      %c0_22 = arith.constant 0 : index
      %c0_23 = arith.constant 0 : index
      %37 = vector.load %arg10[%c0_22, %c0_23] : memref<1x128xf32, #tpu.memory_space<vmem>>, vector<1x128xf32>
      tpu.vector_store %arg10[%c0_22, %c0_23], %36 {strides = array<i32>} : memref<1x128xf32, #tpu.memory_space<vmem>>, vector<1x128xf32>,
    } else {
    }
    %c0_i32_11 = arith.constant 0 : i32
    %22 = arith.cmpi eq, %arg1, %c0_i32_11 : i32
    %23 = arith.extui %22 : i1 to i32
    %c0_i32_12 = arith.constant 0 : i32
    %24 = arith.cmpi ne, %23, %c0_i32_12 : i32
    scf.if %24 {
      %c0_13 = arith.constant 0 : index
      %c0_14 = arith.constant 0 : index
      %25 = vector.load %arg9[%c0_13, %c0_14] : memref<8x128xf32, #tpu.memory_space<vmem>>, vector<8x128xf32>
      %cst_15 = arith.constant dense<0xFF800000> : vector<8xf32>
      %26 = vector.multi_reduction <maximumf>, %25, %cst_15 [1] : vector<8x128xf32> to vector<8xf32>
      %27 = vector.shape_cast %26 : vector<8xf32> to vector<8x1xf32>
      %28 = tpu.iota {dimensions = array<i32: 0>} : vector<8x1xi32>
      %c8_i32 = arith.constant 8 : i32
      %29 = arith.muli %arg0, %c8_i32 : i32
      %30 = vector.broadcast %29 : i32 to vector<8x1xi32>
      %31 = arith.addi %28, %30 : vector<8x1xi32>
      %c0_16 = arith.constant 0 : index
      %32 = memref.load %arg2[%c0_16] : memref<1xi32, #tpu.memory_space<smem>>
      %33 = vector.broadcast %32 : i32 to vector<8x1xi32>
      %34 = arith.cmpi slt, %31, %33 : vector<8x1xi32>
      %cst_17 = arith.constant 1.000000e+00 : f32
      %35 = vector.broadcast %cst_17 : f32 to vector<8x1xf32>
      %36 = arith.subf %35, %27 : vector<8x1xf32>
      %cst_18 = arith.constant 0.000000e+00 : f32
      %37 = vector.broadcast %cst_18 : f32 to vector<8x1xf32>
      %38 = arith.select %34, %36, %37 : vector<8x1xi1>, vector<8x1xf32>
      %39 = vector.shape_cast %38 : vector<8x1xf32> to vector<1x8x1xf32>
      %cst_19 = arith.constant dense<0.000000e+00> : vector<1xf32>
      %40 = vector.multi_reduction <add>, %39, %cst_19 [1, 2] : vector<1x8x1xf32> to vector<1xf32>
      %41 = vector.shape_cast %40 : vector<1xf32> to vector<1x1x1xf32>
      %42 = vector.extract %41[0, 0, 0] : f32 from vector<1x1x1xf32>
      %43 = vector.broadcast %42 : f32 to vector<1x1x128xf32>
      %c0_20 = arith.constant 0 : index
      %c0_21 = arith.constant 0 : index
      %c0_22 = arith.constant 0 : index
      %44 = vector.load %arg6[%c0_20, %c0_21, %c0_22] : memref<1x1x128xf32, #tpu.memory_space<vmem>>, vector<1x1x128xf32>
      tpu.vector_store %arg6[%c0_20, %c0_21, %c0_22], %43 {strides = array<i32>} : memref<1x1x128xf32, #tpu.memory_space<vmem>>, vector<1x1x128xf32>,
      %c0_23 = arith.constant 0 : index
      %c0_24 = arith.constant 0 : index
      %45 = vector.load %arg10[%c0_23, %c0_24] : memref<1x128xf32, #tpu.memory_space<vmem>>, vector<1x128xf32>
      %46 = vector.shape_cast %45 : vector<1x128xf32> to vector<1x1x128xf32>
      %cst_25 = arith.constant dense<0.000000e+00> : vector<1xf32>
      %47 = vector.multi_reduction <add>, %46, %cst_25 [1, 2] : vector<1x1x128xf32> to vector<1xf32>
      %48 = vector.shape_cast %47 : vector<1xf32> to vector<1x1x1xf32>
      %49 = vector.extract %48[0, 0, 0] : f32 from vector<1x1x1xf32>
      %50 = vector.broadcast %49 : f32 to vector<1x1x128xf32>
      %c0_26 = arith.constant 0 : index
      %c0_27 = arith.constant 0 : index
      %c0_28 = arith.constant 0 : index
      %51 = vector.load %arg7[%c0_26, %c0_27, %c0_28] : memref<1x1x128xf32, #tpu.memory_space<vmem>>, vector<1x1x128xf32>
      tpu.vector_store %arg7[%c0_26, %c0_27, %c0_28], %50 {strides = array<i32>} : memref<1x1x128xf32, #tpu.memory_space<vmem>>, vector<1x1x128xf32>,
    } else {
    }
    return
  }
  func.func @transform_0(%arg0: i32, %arg1: i32, %arg2: memref<1xi32, #tpu.memory_space<smem>>) -> (i32, i32) {
    %c0_i32 = arith.constant 0 : i32
    %c0_i32_0 = arith.constant 0 : i32
    return %c0_i32, %arg1 : i32, i32
  }
  func.func @transform_1(%arg0: i32, %arg1: i32, %arg2: memref<1xi32, #tpu.memory_space<smem>>) -> (i32, i32) {
    %c0_i32 = arith.constant 0 : i32
    %c0_i32_0 = arith.constant 0 : i32
    return %c0_i32, %arg1 : i32, i32
  }
  func.func @transform_2(%arg0: i32, %arg1: i32, %arg2: memref<1xi32, #tpu.memory_space<smem>>) -> (i32, i32) {
    %c0_i32 = arith.constant 0 : i32
    %c0_i32_0 = arith.constant 0 : i32
    return %arg0, %c0_i32 : i32, i32
  }
  func.func @transform_3(%arg0: i32, %arg1: i32, %arg2: memref<1xi32, #tpu.memory_space<smem>>) -> (i32, i32, i32) {
    %c0_i32 = arith.constant 0 : i32
    %c0_i32_0 = arith.constant 0 : i32
    %c0_i32_1 = arith.constant 0 : i32
    return %arg0, %c0_i32, %c0_i32_0 : i32, i32, i32
  }
  func.func @transform_4(%arg0: i32, %arg1: i32, %arg2: memref<1xi32, #tpu.memory_space<smem>>) -> (i32, i32, i32) {
    %c0_i32 = arith.constant 0 : i32
    %c0_i32_0 = arith.constant 0 : i32
    %c0_i32_1 = arith.constant 0 : i32
    return %arg0, %c0_i32, %c0_i32_0 : i32, i32, i32
  }
}

</mosaic_0001>

<llo_original>
// kernel: run.1
$region0: #{run.1}
  #allocation0 [shape = 'u32[]', space=smem, size = 0x4, offset = 0x4, fixed_abs, tag = 'smem constant byte address 0x4 - core index']
  #allocation1 [shape = 'u32[144,128]{1,0:T(1,128)}', space=vmem, size = 0x12000, scoped, tag = 'internal scratch']
  #allocation2 [shape = 's32[8,128]{1,0:T(8,128)}', space=vmem, size = 0x1000, scoped, tag = 'scratch operand']
  #allocation3 [shape = 'f32[8,128]{1,0:T(8,128)}', space=vmem, size = 0x1000, scoped, tag = 'scratch operand']
  #allocation4 [shape = 'f32[1,128]{1,0:T(1,128)}', space=vmem, size = 0x200, scoped, tag = 'scratch operand']
  #allocation5 [shape = 's32[1]{0}', space=sflag, size = 0x4, scoped, tag = 'scoped memory for run.1']
  #allocation6 [shape = 's32[1]{0:T(128)S(6)}', space=smem, size = 0x200, scoped, tag = 'prefetched SMEM operand 0']
  %s0 = inlined_call_operand.<no memory space> [shape: s32[1], index: 0, kind: input, shape index: {}]
  %s1 = inlined_call_operand.vmem [shape: f32[1,128], index: 1, kind: input, shape index: {}]
  %s2 = inlined_call_operand.vmem [shape: s32[1,128], index: 2, kind: input, shape index: {}]
  %s3 = inlined_call_operand.vmem [shape: s32[8,1], index: 3, kind: input, shape index: {}]
  %s4 = inlined_call_operand.vmem [shape: f32[1,1,128], index: 4, kind: output, shape index: {0}]
  %s5 = inlined_call_operand.vmem [shape: f32[1,1,128], index: 5, kind: output, shape index: {1}]
  %6 = xla_tuple %s4, %s5
  %s7 = sld [smem:[#allocation0]]
  $region42: #{run.1} parent=0
    _
  %s9 = ssub.s32 1, %s7
  %s10 = scalar_select 0, %s9, %s7
  %11 = sst [smem:[#allocation6]] %s0
  // Predicated region
  $region2: #{run.1} parent=0 // pred_check
    _
  $region3: #{run.1} parent=0 // pred_check_branch
    %13 = sbr.rel (0) target = $region5
  $region4: #{run.1} parent=0 // pred_region
    _
  $region5: #{run.1} parent=0 // pred_fallthru
    _
  // Predicated region
  $region6: #{run.1} parent=0 // pred_check
    _
  $region7: #{run.1} parent=0 // pred_check_branch
    %15 = sbr.rel (0) target = $region9
  $region8: #{run.1} parent=0 // pred_region
    _
  $region9: #{run.1} parent=0 // pred_fallthru
    _
  // Predicated region
  $region10: #{run.1} parent=0 // pred_check
    _
  $region11: #{run.1} parent=0 // pred_check_branch
    %17 = sbr.rel (0) target = $region13
  $region12: #{run.1} parent=0 // pred_region
    _
  $region13: #{run.1} parent=0 // pred_fallthru
    _
  %p18 = scmp.eq.s32.totalorder 0, 0
  // Predicated region
  $region14: #{run.1} parent=0 // pred_check
    %p19 = pneg %p18
  $region15: #{run.1} parent=0 // pred_check_branch
    %21 = sbr.rel (%p19) target = $region17
  $region16: #{run.1} parent=0 // pred_region
    %v22 = vld [vmem:[%s3] sm:$0xff]
    %23 = vset.pattern.permute.xlu0 0
    %24 = vperm.xlu0 %23, %v22
    %v25 = vpop.permute.xlu0 %24
    %26 = vst [vmem:[#allocation2] sm:$0xff] %v25
    %27 = vst [vmem:[#allocation3] sm:$0xff] 0.0
    %28 = vst [vmem:[#allocation4] sm:$0x1] 0.0
  $region17: #{run.1} parent=0 // pred_fallthru
    _
  %v29 = vld [vmem:[#allocation2] sm:$0xff]
  %v30 = vld [vmem:[#allocation3] sm:$0xff]
  %v31 = vld [vmem:[%s2] sm:$0x1]
  %v32 = vld [vmem:[%s1] sm:$0x1]
  %v33 = vlaneseq
  %v34 = vshrl.u32 %v33, 7
  %v35 = vsub.s32 0, %v34
  %v36 = vrot.slane %v31, %v35
  %vm37 = vcmp.eq.s32.totalorder %v36, %v29
  %v39 = vlaneseq
  %v40 = vshrl.u32 %v39, 7
  %v41 = vsub.s32 0, %v40
  %v42 = vrot.slane %v32, %v41
  %v44 = vsel %vm37, %v42, 0.0
  %v45 = vmax.f32 %v30, %v44
  %46 = vst [vmem:[#allocation3] sm:$0xff] %v45
  %p47 = scmp.eq.s32.totalorder 0, 0
  // Predicated region
  $region18: #{run.1} parent=0 // pred_check
    %p48 = pneg %p47
  $region19: #{run.1} parent=0 // pred_check_branch
    %50 = sbr.rel (%p48) target = $region21
  $region20: #{run.1} parent=0 // pred_region
    %v51 = vld [vmem:[#allocation4] sm:$0x1]
    %v52 = vld [vmem:[%s2] sm:$0x1]
    %v53 = vld [vmem:[%s1] sm:$0x1]
    %vm54 = vcmp.eq.s32.totalorder %v52, 0
    %v55 = vsel %vm54, %v53, 0.0
    %v56 = vadd.f32 %v51, %v55
    %57 = vst [vmem:[#allocation4] sm:$0x1] %v56
  $region21: #{run.1} parent=0 // pred_fallthru
    _
  // Predicated region
  $region22: #{run.1} parent=0 // pred_check
    %p58 = pneg %p18
  $region23: #{run.1} parent=0 // pred_check_branch
    %60 = sbr.rel (%p58) target = $region25
  $region24: #{run.1} parent=0 // pred_region
    %v61 = vld [vmem:[#allocation3] sm:$0xff]
    %62 = vmax.xlane.f32.xlu0 %v61
    %v63 = vpop.xlane.xlu0 %62
    %v64 = vlaneseq
    %v65 = vshrl.u32 %v64, 7
    %s66 = smul.u32 0, 8
    %v67 = vstv %s66
    %v68 = vadd.s32 %v65, %v67
    %s69 = sld [smem:[#allocation6]]
    %v70 = vstv %s69
    %vm71 = vcmp.lt.s32.totalorder %v68, %v70
    %v72 = vsub.f32 1.0, %v63
    %v73 = vsel %vm71, %v72, 0.0
    %vm74 = vcmask 7168
    %v75 = vsel %vm74, %v73, 0.0
    %76 = vadd.xlane.f32.xlu0 %v75
    %v77 = vpop.xlane.xlu0 %76
    %v78 = vrot.slane %v77, 4
    %v79 = vadd.f32 %v77, %v78
    %v80 = vrot.slane %v79, 2
    %v81 = vadd.f32 %v79, %v80
    %v82 = vrot.slane %v81, 1
    %v83 = vadd.f32 %v81, %v82
    %s84 = vtos %v83
    %v85 = vstv %s84
    %86 = vst [vmem:[%s4] sm:$0x1] %v85
    %v87 = vld [vmem:[#allocation4] sm:$0x1]
    %vm88 = vcmask 1040384
    %v89 = vsel %vm88, %v87, 0.0
    %90 = vadd.xlane.f32.xlu0 %v89
    %v91 = vpop.xlane.xlu0 %90
    %v92 = vrot.slane %v91, 4
    %v93 = vadd.f32 %v91, %v92
    %v94 = vrot.slane %v93, 2
    %v95 = vadd.f32 %v93, %v94
    %v96 = vrot.slane %v95, 1
    %v97 = vadd.f32 %v95, %v96
    %s98 = vtos %v97
    %v99 = vstv %s98
    %100 = vst [vmem:[%s5] sm:$0x1] %v99
  $region25: #{run.1} parent=0 // pred_fallthru
    _
  // Predicated region
  $region26: #{run.1} parent=0 // pred_check
    _
  $region27: #{run.1} parent=0 // pred_check_branch
    %102 = sbr.rel (0) target = $region29
  $region28: #{run.1} parent=0 // pred_region
    _
  $region29: #{run.1} parent=0 // pred_fallthru
    _
  // Predicated region
  $region30: #{run.1} parent=0 // pred_check
    _
  $region31: #{run.1} parent=0 // pred_check_branch
    %104 = sbr.rel (0) target = $region33
  $region32: #{run.1} parent=0 // pred_region
    _
  $region33: #{run.1} parent=0 // pred_fallthru
    _
  // Predicated region
  $region34: #{run.1} parent=0 // pred_check
    _
  $region35: #{run.1} parent=0 // pred_check_branch
    %106 = sbr.rel (0) target = $region37
  $region36: #{run.1} parent=0 // pred_region
    _
  $region37: #{run.1} parent=0 // pred_fallthru
    _
  // Predicated region
  $region38: #{run.1} parent=0 // pred_check
    _
  $region39: #{run.1} parent=0 // pred_check_branch
    %108 = sbr.rel (0) target = $region41
  $region40: #{run.1} parent=0 // pred_region
    _
  $region41: #{run.1} parent=0 // pred_fallthru
    _

</llo_original>
